<compile_context>
chip_gen: v7x
topology: tpu7x:2x2x1
jax: 0.10.0
libtpu: 0.0.40
codegen_flags: <defaults>
</compile_context>

<pallas_src>
import functools
import math

import jax
import jax.numpy as jnp
from jax import lax
from jax.experimental import pallas as pl
from jax.experimental.pallas import tpu as pltpu

EPS = 1e-5  # torch.nn.LayerNorm default eps
_INV_SQRT2 = 1.0 / math.sqrt(2.0)
_SQRT_2_OVER_PI = math.sqrt(2.0 / math.pi)


def _ln_gelu_kernel(x_ref, w_ref, b_ref, o_ref, *, approximate):
    """LayerNorm over the feature (sublane) axis + GELU.

    x_ref: (TB, F, TS) tile  -- features on sublanes, seq on lanes
    w_ref: (1, F, 1) LayerNorm weight (gamma)
    b_ref: (1, F, 1) LayerNorm bias   (beta)
    o_ref: (TB, F, TS) output tile
    """
    x = x_ref[...].astype(jnp.float32)
    mean = jnp.mean(x, axis=1, keepdims=True)            # (TB, 1, TS): per (b, seq) position
    centered = x - mean
    var = jnp.mean(centered * centered, axis=1, keepdims=True)
    y = centered * lax.rsqrt(var + EPS) * w_ref[...] + b_ref[...]
    if approximate:
        # tanh GELU -> EUP slot (free alongside VALU on a mem-bound kernel).
        inner = _SQRT_2_OVER_PI * (y + 0.044715 * (y * y * y))
        g = 0.5 * y * (1.0 + jnp.tanh(inner))
    else:
        # Exact erf GELU == PyTorch F.gelu default.
        g = 0.5 * y * (1.0 + lax.erf(y * _INV_SQRT2))
    o_ref[...] = g.astype(o_ref.dtype)
    # NOTE: padded columns of a ragged tail block may compute NaN/Inf internally
    # (stale VMEM through rsqrt); those lanes are never written back, but this
    # would trip a NaN-trapping debug run.


def _choose_tiles(B, F, S, itemsize, target_block_bytes):
    """Pick (batch_tile, seq_tile) giving ~target_block_bytes, lane-dense blocks."""
    per_batch = F * S * itemsize
    if per_batch >= target_block_bytes:
        # Tile the seq axis only (multiple of 128 -> unmasked lane-dense stores).
        t = (target_block_bytes // max(F * itemsize, 1)) // 128 * 128
        t = max(int(t), 128)
        seq_tile = S if t >= S else t
        batch_tile = 1
    else:
        # Whole seq per batch is small: pack several batches per block.
        seq_tile = S
        batch_tile = max(1, min(B, target_block_bytes // max(per_batch, 1)))

    # v7x has 2 TensorCores sharing the "parallel" grid axes: make sure there
    # are at least 2 grid steps when we can split without tiny blocks.
    steps = pl.cdiv(B, batch_tile) * pl.cdiv(S, seq_tile)
    if steps < 2:
        if batch_tile > 1:
            batch_tile = max(1, (batch_tile + 1) // 2)
        elif seq_tile == S and S >= 256:
            half = ((S + 1) // 2 + 127) // 128 * 128
            if half < S:
                seq_tile = half
    return batch_tile, seq_tile


def custom_cnn_forward(
    x,
    weight,
    bias,
    *,
    same_shape=False,
    approximate_gelu=False,
    batch_tile=None,
    seq_tile=None,
    target_block_bytes=4 * 1024 * 1024,
):
    """Pallas implementation of CustomCNN.forward (eval mode, dropout = identity).

    Args:
      x: (B, n_features, seq) -- same NCL layout PyTorch expects.  f32 or bf16.
      weight, bias: (n_features,) LayerNorm affine params.
      same_shape: if True, return (B, n_features, seq); else (B, seq, n_features).
      approximate_gelu: tanh GELU (EUP) instead of exact erf GELU.
      batch_tile / seq_tile: optional tile overrides (seq_tile must be a
        multiple of 128 or equal to seq).
      target_block_bytes: target per-block footprint for auto tile selection.
    """
    B, F, S = x.shape
    itemsize = jnp.dtype(x.dtype).itemsize

    auto_bt, auto_st = _choose_tiles(B, F, S, itemsize, target_block_bytes)
    bt = int(batch_tile) if batch_tile is not None else auto_bt
    st = int(seq_tile) if seq_tile is not None else auto_st
    bt = min(max(bt, 1), B)
    st = min(max(st, 1), S)
    if st != S and st % 128 != 0:
        raise ValueError("seq_tile must be a multiple of 128 or equal to seq")

    grid = (pl.cdiv(B, bt), pl.cdiv(S, st))
    w3 = weight.reshape(1, F, 1).astype(jnp.float32)
    b3 = bias.reshape(1, F, 1).astype(jnp.float32)

    kernel = functools.partial(_ln_gelu_kernel, approximate=approximate_gelu)

    out_ncl = pl.pallas_call(
        kernel,
        out_shape=jax.ShapeDtypeStruct((B, F, S), x.dtype),
        grid_spec=pltpu.PrefetchScalarGridSpec(
            num_scalar_prefetch=0,
            grid=grid,
            in_specs=[
                # native NCL layout, blocked over (batch, seq)
                pl.BlockSpec((bt, F, st), lambda b, s: (b, 0, s)),
                # gamma/beta stay resident in VMEM across the whole grid
                pl.BlockSpec((1, F, 1), lambda b, s: (0, 0, 0)),
                pl.BlockSpec((1, F, 1), lambda b, s: (0, 0, 0)),
            ],
            out_specs=pl.BlockSpec((bt, F, st), lambda b, s: (b, 0, s)),
        ),
        compiler_params=pltpu.CompilerParams(
            dimension_semantics=("parallel", "parallel"),
            # 4 MiB blocks, double-buffered in+out, plus f32 compute temps:
            # above v5e's 16 MiB default scoped limit, well under every chip's
            # physical VMEM (64 MiB on v7x).
            vmem_limit_bytes=40 * 1024 * 1024,
        ),
    )(x, w3, b3)

    # TODO(synk): nn.Dropout in training mode (random in-kernel mask via
    # pltpu.prng_seed/prng_random_bits) not implemented; eval-mode identity used.
    if same_shape:
        return out_ncl
    # TODO(synk): the (B,F,S)->(B,S,F) swap stays as one XLA transpose; fusing a
    # minor (F, seq_tile) transpose + lane-width-F masked store in-kernel is not
    # guaranteed to lower for these shapes, so the safe XLA fallback is kept.
    return jnp.transpose(out_ncl, (0, 2, 1))


def _reference(x, weight, bias, same_shape=False):
    """Pure-JAX reference matching the PyTorch forward (eval mode, exact GELU)."""
    xt = jnp.transpose(x, (0, 2, 1))
    mean = jnp.mean(xt, axis=-1, keepdims=True)
    var = jnp.mean((xt - mean) ** 2, axis=-1, keepdims=True)
    y = (xt - mean) / jnp.sqrt(var + EPS) * weight + bias
    g = 0.5 * y * (1.0 + lax.erf(y * _INV_SQRT2))
    if same_shape:
        return jnp.transpose(g, (0, 2, 1))
    return g


if __name__ == "__main__":
    key = jax.random.PRNGKey(0)
    kx, kw, kb = jax.random.split(key, 3)

    B, n_features, seq = 2, 32, 16
    x = jax.random.normal(kx, (B, n_features, seq), dtype=jnp.float32)
    weight = 1.0 + 0.1 * jax.random.normal(kw, (n_features,), dtype=jnp.float32)
    bias = 0.05 * jax.random.normal(kb, (n_features,), dtype=jnp.float32)

    # same_shape=False path: output (B, seq, n_features)
    out = jax.block_until_ready(custom_cnn_forward(x, weight, bias, same_shape=False))
    ref = _reference(x, weight, bias, same_shape=False)
    assert out.shape == (B, seq, n_features)
    assert jnp.allclose(out, ref, atol=1e-5, rtol=1e-5)

    # same_shape=True path: output (B, n_features, seq), zero XLA transposes
    out2 = jax.block_until_ready(custom_cnn_forward(x, weight, bias, same_shape=True))
    ref2 = _reference(x, weight, bias, same_shape=True)
    assert out2.shape == (B, n_features, seq)
    assert jnp.allclose(out2, ref2, atol=1e-5, rtol=1e-5)

    # batch + seq blocking, ragged last block on BOTH grid axes
    B2, S2 = 5, 333
    x2 = jax.random.normal(kx, (B2, n_features, S2), dtype=jnp.float32)
    out3 = jax.block_until_ready(
        custom_cnn_forward(x2, weight, bias, same_shape=True, batch_tile=2, seq_tile=128)
    )
    ref3 = _reference(x2, weight, bias, same_shape=True)
    assert out3.shape == (B2, n_features, S2)
    assert jnp.allclose(out3, ref3, atol=1e-5, rtol=1e-5)

    # auto tile selection (batch-blocked, grid split for the 2-TC case)
    out3b = jax.block_until_ready(custom_cnn_forward(x2, weight, bias, same_shape=True))
    assert jnp.allclose(out3b, ref3, atol=1e-5, rtol=1e-5)

    # bf16 I/O (halves HBM traffic); compute stays f32 in-kernel
    xb = x2.astype(jnp.bfloat16)
    out4 = jax.block_until_ready(
        custom_cnn_forward(xb, weight, bias, same_shape=True, batch_tile=2)
    )
    ref4 = _reference(xb.astype(jnp.float32), weight, bias, same_shape=True)
    assert out4.dtype == jnp.bfloat16
    assert jnp.allclose(out4.astype(jnp.float32), ref4, atol=3e-2, rtol=3e-2)

    # approximate (tanh / EUP) GELU path -- small, documented deviation from erf
    out5 = jax.block_until_ready(
        custom_cnn_forward(x2, weight, bias, same_shape=True, approximate_gelu=True)
    )
    assert jnp.allclose(out5, ref3, atol=5e-3, rtol=5e-3)

    print("KERNEL_OK")
</pallas_src>

<mosaic_0001>
module attributes {stable_mosaic.version = 11 : i64} {
  func.func @_ln_gelu_kernel(%arg0: i32, %arg1: i32, %arg2: memref<1x32x16xf32, #tpu.memory_space<vmem>>, %arg3: memref<1x32x1xf32, #tpu.memory_space<vmem>>, %arg4: memref<1x32x1xf32, #tpu.memory_space<vmem>>, %arg5: memref<1x32x16xf32, #tpu.memory_space<vmem>>) attributes {dimension_semantics = [#tpu.dimension_semantics<parallel>, #tpu.dimension_semantics<parallel>], iteration_bounds = array<i64: 2, 1>, scalar_prefetch = 0 : i64, scratch_operands = 0 : i64, tpu.core_type = #tpu.core_type<tc>, window_params = [{transform_indices = @transform_0, window_bounds = array<i64: 1, 32, 16>}, {pipeline_mode = #tpu.pipeline_mode<synchronous>, transform_indices = @transform_1, window_bounds = array<i64: 1, 32, 1>}, {pipeline_mode = #tpu.pipeline_mode<synchronous>, transform_indices = @transform_2, window_bounds = array<i64: 1, 32, 1>}, {transform_indices = @transform_3, window_bounds = array<i64: 1, 32, 16>}]} {
    %c0 = arith.constant 0 : index
    %c0_0 = arith.constant 0 : index
    %c0_1 = arith.constant 0 : index
    %0 = vector.load %arg2[%c0, %c0_0, %c0_1] : memref<1x32x16xf32, #tpu.memory_space<vmem>>, vector<1x32x16xf32>
    %cst = arith.constant dense<0.000000e+00> : vector<1x16xf32>
    %1 = vector.multi_reduction <add>, %0, %cst [1] : vector<1x32x16xf32> to vector<1x16xf32>
    %2 = vector.shape_cast %1 : vector<1x16xf32> to vector<1x1x16xf32>
    %cst_2 = arith.constant 3.200000e+01 : f32
    %3 = vector.broadcast %cst_2 : f32 to vector<1x1x16xf32>
    %4 = arith.divf %2, %3 : vector<1x1x16xf32>
    %5 = vector.broadcast %4 : vector<1x1x16xf32> to vector<1x32x16xf32>
    %6 = arith.subf %0, %5 : vector<1x32x16xf32>
    %7 = arith.mulf %6, %6 : vector<1x32x16xf32>
    %cst_3 = arith.constant dense<0.000000e+00> : vector<1x16xf32>
    %8 = vector.multi_reduction <add>, %7, %cst_3 [1] : vector<1x32x16xf32> to vector<1x16xf32>
    %9 = vector.shape_cast %8 : vector<1x16xf32> to vector<1x1x16xf32>
    %cst_4 = arith.constant 3.200000e+01 : f32
    %10 = vector.broadcast %cst_4 : f32 to vector<1x1x16xf32>
    %11 = arith.divf %9, %10 : vector<1x1x16xf32>
    %cst_5 = arith.constant 9.99999974E-6 : f32
    %12 = vector.broadcast %cst_5 : f32 to vector<1x1x16xf32>
    %13 = arith.addf %11, %12 : vector<1x1x16xf32>
    %14 = math.rsqrt %13 : vector<1x1x16xf32>
    %15 = vector.broadcast %14 : vector<1x1x16xf32> to vector<1x32x16xf32>
    %16 = arith.mulf %6, %15 : vector<1x32x16xf32>
    %c0_6 = arith.constant 0 : index
    %c0_7 = arith.constant 0 : index
    %c0_8 = arith.constant 0 : index
    %17 = vector.load %arg3[%c0_6, %c0_7, %c0_8] : memref<1x32x1xf32, #tpu.memory_space<vmem>>, vector<1x32x1xf32>
    %18 = vector.broadcast %17 : vector<1x32x1xf32> to vector<1x32x16xf32>
    %19 = arith.mulf %16, %18 : vector<1x32x16xf32>
    %c0_9 = arith.constant 0 : index
    %c0_10 = arith.constant 0 : index
    %c0_11 = arith.constant 0 : index
    %20 = vector.load %arg4[%c0_9, %c0_10, %c0_11] : memref<1x32x1xf32, #tpu.memory_space<vmem>>, vector<1x32x1xf32>
    %21 = vector.broadcast %20 : vector<1x32x1xf32> to vector<1x32x16xf32>
    %22 = arith.addf %19, %21 : vector<1x32x16xf32>
    %cst_12 = arith.constant 5.000000e-01 : f32
    %23 = vector.broadcast %cst_12 : f32 to vector<1x32x16xf32>
    %24 = arith.mulf %23, %22 : vector<1x32x16xf32>
    %cst_13 = arith.constant 0.707106769 : f32
    %25 = vector.broadcast %cst_13 : f32 to vector<1x32x16xf32>
    %26 = arith.mulf %22, %25 : vector<1x32x16xf32>
    %27 = math.erf %26 : vector<1x32x16xf32>
    %cst_14 = arith.constant 1.000000e+00 : f32
    %28 = vector.broadcast %cst_14 : f32 to vector<1x32x16xf32>
    %29 = arith.addf %28, %27 : vector<1x32x16xf32>
    %30 = arith.mulf %24, %29 : vector<1x32x16xf32>
    %c0_15 = arith.constant 0 : index
    %c0_16 = arith.constant 0 : index
    %c0_17 = arith.constant 0 : index
    %31 = vector.load %arg5[%c0_15, %c0_16, %c0_17] : memref<1x32x16xf32, #tpu.memory_space<vmem>>, vector<1x32x16xf32>
    tpu.vector_store %arg5[%c0_15, %c0_16, %c0_17], %30 {strides = array<i32>} : memref<1x32x16xf32, #tpu.memory_space<vmem>>, vector<1x32x16xf32>,
    return
  }
  func.func @transform_0(%arg0: i32, %arg1: i32) -> (i32, i32, i32) {
    %c0_i32 = arith.constant 0 : i32
    %c0_i32_0 = arith.constant 0 : i32
    return %arg0, %c0_i32, %arg1 : i32, i32, i32
  }
  func.func @transform_1(%arg0: i32, %arg1: i32) -> (i32, i32, i32) {
    %c0_i32 = arith.constant 0 : i32
    %c0_i32_0 = arith.constant 0 : i32
    %c0_i32_1 = arith.constant 0 : i32
    %c0_i32_2 = arith.constant 0 : i32
    return %c0_i32, %c0_i32_0, %c0_i32_1 : i32, i32, i32
  }
  func.func @transform_2(%arg0: i32, %arg1: i32) -> (i32, i32, i32) {
    %c0_i32 = arith.constant 0 : i32
    %c0_i32_0 = arith.constant 0 : i32
    %c0_i32_1 = arith.constant 0 : i32
    %c0_i32_2 = arith.constant 0 : i32
    return %c0_i32, %c0_i32_0, %c0_i32_1 : i32, i32, i32
  }
  func.func @transform_3(%arg0: i32, %arg1: i32) -> (i32, i32, i32) {
    %c0_i32 = arith.constant 0 : i32
    %c0_i32_0 = arith.constant 0 : i32
    return %arg0, %c0_i32, %arg1 : i32, i32, i32
  }
}

</mosaic_0001>

<llo_original>
// kernel: tpu_custom_call.1
$region0: #{tpu_custom_call.1}
  #allocation0 [shape = 'u32[]', space=smem, size = 0x4, offset = 0x4, fixed_abs, tag = 'smem constant byte address 0x4 - core index']
  #allocation1 [shape = 'u32[144,128]{1,0:T(1,128)}', space=vmem, size = 0x12000, scoped, tag = 'internal scratch']
  %s0 = inlined_call_operand.vmem [shape: f32[2,32,16], index: 0, kind: input, shape index: {}]
  %s1 = inlined_call_operand.vmem [shape: f32[1,32,1], index: 1, kind: input, shape index: {}]
  %s2 = inlined_call_operand.vmem [shape: f32[1,32,1], index: 2, kind: input, shape index: {}]
  %s3 = inlined_call_operand.vmem [shape: f32[2,32,16], index: 3, kind: output, shape index: {}]
  %s4 = sld [smem:[#allocation0]]
  $region45: #{tpu_custom_call.1} parent=0
    _
  %s6 = ssub.s32 1, %s4
  %s7 = scalar_select 0, %s6, %s4
  loop: start=0, step=1, limit=4
  $region2: #{tpu_custom_call.1} parent=0 // loop_pre_header
    _
  $region3: #{tpu_custom_call.1} parent=0 // loop_header
    %s9 = sphi 0, %s13
    %p10 = scmp.ge.s32.totalorder %s9, 4
    %s16 = sphi 0, %s28
    %s17 = sphi 0, %s24
    %s18 = sphi 0, %s16
    %s19 = sphi 0, %s17
    %s20 = sphi 0, %s18
    %s21 = sphi 0, %s19
    %s33 = sphi 0, %s35
    %s36 = sphi 0, %s33
    %s37 = sphi 0, %s36
    %s53 = sphi 0, %s37
    %s57 = sphi 0, %s57
    %s59 = sphi 0, %s57
    %s60 = sphi 0, %s59
    %s74 = sphi 0, %s60
    %s78 = sphi 0, %s78
    %s80 = sphi 0, %s78
    %s81 = sphi 0, %s80
    %s95 = sphi 0, %s81
    %s103 = sphi 0, %s105
    %s106 = sphi 0, %s103
    %s107 = sphi 0, %s106
    %s123 = sphi 0, %s107
  $region4: #{tpu_custom_call.1} parent=0 // loop_header_branch
    %12 = sbr.rel (%p10) target = $region8
  $region5: #{tpu_custom_call.1} parent=0 // loop_body
    %s14 = ssub.s32 %s9, 1
    %s15 = ssub.s32 %s9, 2
    %s22 = sadd.s32 1, %s17
    %p23 = scmp.ge.s32.totalorder %s22, 1
    %s24 = scalar_select %p23, 0, %s22
    %s25 = sadd.s32 1, %s16
    %s26 = scalar_select %p23, %s25, %s16
    %p27 = scmp.ge.s32.totalorder %s26, 2
    %s28 = scalar_select %p27, 0, %s26
    %s29 = ssub.s32 %s16, %s28
    %s30 = ssub.s32 %s17, %s24
    %s31 = sor.u32 %s29, %s30
    %p32 = scmp.eq.s32.totalorder %s31, 0
    %s34 = sadd.s32 %s33, 1
    %s35 = scalar_select %p32, %s33, %s34
    %p38 = pneg %p32
    %p39 = scmp.eq.s32.totalorder %s9, 1
    %p40 = por %p38, %p39
    %p41 = scmp.ne.s32.totalorder %s33, %s36
    %p42 = scmp.eq.s32.totalorder %s9, 0
    %p43 = por %p41, %p42
    %p44 = scmp.ne.s32.totalorder %s33, %s36
    %p45 = scmp.eq.s32.totalorder %s14, 1
    %p46 = por %p44, %p45
    %p47 = scmp.ne.s32.totalorder %s36, %s37
    %p48 = scmp.eq.s32.totalorder %s14, 0
    %p49 = por %p47, %p48
    %p50 = scmp.ne.s32.totalorder %s36, %s37
    %p51 = scmp.eq.s32.totalorder %s15, 1
    %p52 = por %p50, %p51
    %p54 = scmp.ne.s32.totalorder %s37, %s53
    %p55 = scmp.eq.s32.totalorder %s15, 0
    %p56 = por %p54, %p55
    %s58 = sadd.s32 %s57, 1
    %p61 = scmp.eq.s32.totalorder %s9, 1
    %p62 = scmp.ne.s32.totalorder %s57, %s59
    %p63 = scmp.eq.s32.totalorder %s9, 0
    %p64 = por %p62, %p63
    %p65 = scmp.ne.s32.totalorder %s57, %s59
    %p66 = scmp.eq.s32.totalorder %s14, 1
    %p67 = por %p65, %p66
    %p68 = scmp.ne.s32.totalorder %s59, %s60
    %p69 = scmp.eq.s32.totalorder %s14, 0
    %p70 = por %p68, %p69
    %p71 = scmp.ne.s32.totalorder %s59, %s60
    %p72 = scmp.eq.s32.totalorder %s15, 1
    %p73 = por %p71, %p72
    %p75 = scmp.ne.s32.totalorder %s60, %s74
    %p76 = scmp.eq.s32.totalorder %s15, 0
    %p77 = por %p75, %p76
    %s79 = sadd.s32 %s78, 1
    %p82 = scmp.eq.s32.totalorder %s9, 1
    %p83 = scmp.ne.s32.totalorder %s78, %s80
    %p84 = scmp.eq.s32.totalorder %s9, 0
    %p85 = por %p83, %p84
    %p86 = scmp.ne.s32.totalorder %s78, %s80
    %p87 = scmp.eq.s32.totalorder %s14, 1
    %p88 = por %p86, %p87
    %p89 = scmp.ne.s32.totalorder %s80, %s81
    %p90 = scmp.eq.s32.totalorder %s14, 0
    %p91 = por %p89, %p90
    %p92 = scmp.ne.s32.totalorder %s80, %s81
    %p93 = scmp.eq.s32.totalorder %s15, 1
    %p94 = por %p92, %p93
    %p96 = scmp.ne.s32.totalorder %s81, %s95
    %p97 = scmp.eq.s32.totalorder %s15, 0
    %p98 = por %p96, %p97
    %s99 = ssub.s32 %s16, %s28
    %s100 = ssub.s32 %s17, %s24
    %s101 = sor.u32 %s99, %s100
    %p102 = scmp.eq.s32.totalorder %s101, 0
    %s104 = sadd.s32 %s103, 1
    %s105 = scalar_select %p102, %s103, %s104
    %p108 = pneg %p102
    %p109 = scmp.eq.s32.totalorder %s9, 1
    %p110 = por %p108, %p109
    %p111 = scmp.ne.s32.totalorder %s103, %s106
    %p112 = scmp.eq.s32.totalorder %s9, 0
    %p113 = por %p111, %p112
    %p114 = scmp.ne.s32.totalorder %s103, %s106
    %p115 = scmp.eq.s32.totalorder %s14, 1
    %p116 = por %p114, %p115
    %p117 = scmp.ne.s32.totalorder %s106, %s107
    %p118 = scmp.eq.s32.totalorder %s14, 0
    %p119 = por %p117, %p118
    %p120 = scmp.ne.s32.totalorder %s106, %s107
    %p121 = scmp.eq.s32.totalorder %s15, 1
    %p122 = por %p120, %p121
    %p124 = scmp.ne.s32.totalorder %s107, %s123
    %p125 = scmp.eq.s32.totalorder %s15, 0
    %p126 = por %p124, %p125
    %p127 = scmp.le.s32.totalorder 1, %s9
    %p128 = scmp.lt.s32.totalorder %s9, 3
    %p129 = pnand %p127, %p128
    %p130 = pneg %p129
    // Predicated region
    $region9: #{tpu_custom_call.1} parent=5 // pred_check
      _
    $region10: #{tpu_custom_call.1} parent=5 // pred_check_branch
      %132 = sbr.rel (%p129) target = $region12
    $region11: #{tpu_custom_call.1} parent=5 // pred_region
      %s133 = ssub.s32 %s9, 1
      // Predicated region
      $region13: #{tpu_custom_call.1} parent=11 // pred_check
        %p134 = pneg %p70
      $region14: #{tpu_custom_call.1} parent=11 // pred_check_branch
        %136 = sbr.rel (%p134) target = $region16
      $region15: #{tpu_custom_call.1} parent=11 // pred_region
        _
      $region16: #{tpu_custom_call.1} parent=11 // pred_fallthru
        _
      // Predicated region
      $region17: #{tpu_custom_call.1} parent=11 // pred_check
        %p137 = pneg %p91
      $region18: #{tpu_custom_call.1} parent=11 // pred_check_branch
        %139 = sbr.rel (%p137) target = $region20
      $region19: #{tpu_custom_call.1} parent=11 // pred_region
        _
      $region20: #{tpu_custom_call.1} parent=11 // pred_fallthru
        _
    $region12: #{tpu_custom_call.1} parent=5 // pred_fallthru
      _
    %p140 = scmp.lt.s32.totalorder %s9, 2
    // Predicated region
    $region21: #{tpu_custom_call.1} parent=5 // pred_check
      %p141 = pneg %p140
    $region22: #{tpu_custom_call.1} parent=5 // pred_check_branch
      %143 = sbr.rel (%p141) target = $region24
    $region23: #{tpu_custom_call.1} parent=5 // pred_region
      // Predicated region
      $region25: #{tpu_custom_call.1} parent=23 // pred_check
        %p144 = pneg %p43
      $region26: #{tpu_custom_call.1} parent=23 // pred_check_branch
        %146 = sbr.rel (%p144) target = $region28
      $region27: #{tpu_custom_call.1} parent=23 // pred_region
        %p147 = scmp.lt.s32.totalorder %s16, 1
        %s148 = scalar_select %p147, %s16, 1
        %p149 = scmp.lt.s32.totalorder %s17, 0
        %s150 = scalar_select %p149, %s17, 0
        %s151 = smul.addr %s148, 4
        %s152 = sadd.s32 %s150, %s151
        %s153 = smul.addr %s152, 8
        %s154 = scalar_lea.vmem %s0, %s153
      $region28: #{tpu_custom_call.1} parent=23 // pred_fallthru
        _
    $region24: #{tpu_custom_call.1} parent=5 // pred_fallthru
      _
    %p155 = scmp.le.s32.totalorder 1, %s9
    %p156 = scmp.lt.s32.totalorder %s9, 3
    %p157 = pnand %p155, %p156
    %p158 = pneg %p157
    // Predicated region
    $region29: #{tpu_custom_call.1} parent=5 // pred_check
      _
    $region30: #{tpu_custom_call.1} parent=5 // pred_check_branch
      %160 = sbr.rel (%p157) target = $region32
    $region31: #{tpu_custom_call.1} parent=5 // pred_region
      %s161 = ssub.s32 %s9, 1
      %p162 = scmp.lt.s32.totalorder %s18, 1
      %s163 = scalar_select %p162, %s18, 1
      %p164 = scmp.lt.s32.totalorder %s19, 0
      %s165 = scalar_select %p164, %s19, 0
      %s166 = smul.addr %s163, 4
      %s167 = sadd.s32 %s165, %s166
      %s168 = smul.addr %s167, 8
      %s169 = scalar_lea.vmem %s0, %s168
      %p170 = pneg %p49
      %p171 = pneg %p46
      %p172 = pneg %p70
      %p173 = pneg %p67
      %p174 = pneg %p91
      %p175 = pneg %p88
      %p176 = pneg %p119
      %p177 = pneg %p116
      %p178 = scmp.lt.s32.totalorder %s18, 1
      %s179 = scalar_select %p178, %s18, 1
      %p180 = scmp.lt.s32.totalorder %s19, 0
      %s181 = scalar_select %p180, %s19, 0
      %s182 = smul.addr %s179, 4
      %s183 = sadd.s32 %s181, %s182
      %s184 = smul.addr %s183, 8
      %s185 = scalar_lea.vmem %s3, %s184
      %p186 = scmp.lt.s32.totalorder %s18, 1
      %s187 = scalar_select %p186, %s18, 1
      %p188 = scmp.lt.s32.totalorder %s19, 0
      %s189 = scalar_select %p188, %s19, 0
      %s190 = smul.addr %s187, 4
      %s191 = sadd.s32 %s189, %s190
      %s192 = smul.addr %s191, 8
      %s193 = scalar_lea.vmem %s0, %s192
      %p194 = scmp.lt.s32.totalorder %s18, 1
      %s195 = scalar_select %p194, %s18, 1
      %p196 = scmp.lt.s32.totalorder %s19, 0
      %s197 = scalar_select %p196, %s19, 0
      %s198 = smul.addr %s195, 4
      %s199 = sadd.s32 %s197, %s198
      %s200 = smul.addr %s199, 8
      %s201 = scalar_lea.vmem %s3, %s200
      %v202 = vld [vmem:[%s193] sm:$0xff]
      %v203 = vld [vmem:[%s193 + $0x8] sm:$0xff]
      %v204 = vld [vmem:[%s193 + $0x10] sm:$0xff]
      %v205 = vld [vmem:[%s193 + $0x18] sm:$0xff]
      %vm206 = vcmask 130048
      %v207 = vsel %vm206, %v202, 0.0
      %v208 = vsel %vm206, %v203, 0.0
      %v209 = vadd.f32 %v207, %v208
      %v210 = vsel %vm206, %v204, 0.0
      %v211 = vadd.f32 %v209, %v210
      %v212 = vsel %vm206, %v205, 0.0
      %v213 = vadd.f32 %v211, %v212
      %v214 = vrot.slane %v213, 4
      %v215 = vadd.f32 %v213, %v214
      %v216 = vrot.slane %v215, 2
      %v217 = vadd.f32 %v215, %v216
      %v218 = vrot.slane %v217, 1
      %v219 = vadd.f32 %v217, %v218
      %v220 = vrcp.pop 32.0
      %v221 = vmul.f32 %v219, %v220
      %v222 = vsub.f32 %v202, %v221
      %v223 = vsub.f32 %v203, %v221
      %v224 = vsub.f32 %v204, %v221
      %v225 = vsub.f32 %v205, %v221
      %v226 = vmul.f32 %v222, %v222
      %v227 = vmul.f32 %v223, %v223
      %v228 = vmul.f32 %v224, %v224
      %v229 = vmul.f32 %v225, %v225
      %v230 = vsel %vm206, %v226, 0.0
      %v231 = vsel %vm206, %v227, 0.0
      %v232 = vadd.f32 %v230, %v231
      %v233 = vsel %vm206, %v228, 0.0
      %v234 = vadd.f32 %v232, %v233
      %v235 = vsel %vm206, %v229, 0.0
      %v236 = vadd.f32 %v234, %v235
      %v237 = vrot.slane %v236, 4
      %v238 = vadd.f32 %v236, %v237
      %v239 = vrot.slane %v238, 2
      %v240 = vadd.f32 %v238, %v239
      %v241 = vrot.slane %v240, 1
      %v242 = vadd.f32 %v240, %v241
      %v243 = vmul.f32 %v242, %v220
      %v244 = vadd.f32 %v243, 1e-05
      %v245 = vrsqrt.pop %v244
      %v246 = vmul.f32 %v222, %v245
      %v247 = vmul.f32 %v223, %v245
      %v248 = vmul.f32 %v224, %v245
      %v249 = vmul.f32 %v225, %v245
      %v250 = vld [vmem:[%s1] sm:$0xff]
      %v251 = vld [vmem:[%s1 + $0x8] sm:$0xff]
      %v252 = vld [vmem:[%s1 + $0x10] sm:$0xff]
      %v253 = vld [vmem:[%s1 + $0x18] sm:$0xff]
      %255 = vset.pattern.permute.xlu0 0
      %256 = vperm.xlu0 %255, %v250
      %v257 = vpop.permute.xlu0 %256
      %260 = vset.pattern.permute.xlu0 0
      %261 = vperm.xlu0 %260, %v251
      %v262 = vpop.permute.xlu0 %261
      %265 = vset.pattern.permute.xlu0 0
      %266 = vperm.xlu0 %265, %v252
      %v267 = vpop.permute.xlu0 %266
      %270 = vset.pattern.permute.xlu0 0
      %271 = vperm.xlu0 %270, %v253
      %v272 = vpop.permute.xlu0 %271
      %v274 = vmul.f32 %v246, %v257
      %v275 = vmul.f32 %v247, %v262
      %v276 = vmul.f32 %v248, %v267
      %v277 = vmul.f32 %v249, %v272
      %v278 = vld [vmem:[%s2] sm:$0xff]
      %v279 = vld [vmem:[%s2 + $0x8] sm:$0xff]
      %v280 = vld [vmem:[%s2 + $0x10] sm:$0xff]
      %v281 = vld [vmem:[%s2 + $0x18] sm:$0xff]
      %283 = vset.pattern.permute.xlu0 0
      %284 = vperm.xlu0 %283, %v278
      %v285 = vpop.permute.xlu0 %284
      %288 = vset.pattern.permute.xlu0 0
      %289 = vperm.xlu0 %288, %v279
      %v290 = vpop.permute.xlu0 %289
      %293 = vset.pattern.permute.xlu0 0
      %294 = vperm.xlu0 %293, %v280
      %v295 = vpop.permute.xlu0 %294
      %298 = vset.pattern.permute.xlu0 0
      %299 = vperm.xlu0 %298, %v281
      %v300 = vpop.permute.xlu0 %299
      %v302 = vadd.f32 %v274, %v285
      %v303 = vadd.f32 %v275, %v290
      %v304 = vadd.f32 %v276, %v295
      %v305 = vadd.f32 %v277, %v300
      %v306 = vmul.f32 %v302, 0.5
      %v307 = vmul.f32 %v303, 0.5
      %v308 = vmul.f32 %v304, 0.5
      %v309 = vmul.f32 %v305, 0.5
      %v310 = vmul.f32 %v302, 0.70710677
      %v311 = vmul.f32 %v303, 0.70710677
      %v312 = vmul.f32 %v304, 0.70710677
      %v313 = vmul.f32 %v305, 0.70710677
      %v314 = verf.f32.pop %v310
      %v315 = verf.f32.pop %v311
      %v316 = verf.f32.pop %v312
      %v317 = verf.f32.pop %v313
      %v318 = vadd.f32 %v314, 1.0
      %v319 = vadd.f32 %v315, 1.0
      %v320 = vadd.f32 %v316, 1.0
      %v321 = vadd.f32 %v317, 1.0
      %v322 = vmul.f32 %v306, %v318
      %v323 = vmul.f32 %v307, %v319
      %v324 = vmul.f32 %v308, %v320
      %v325 = vmul.f32 %v309, %v321
      %326 = vst.msk [vmem:[%s201] sm:$0xff] %vm206, %v322
      %327 = vst.msk [vmem:[%s201 + $0x8] sm:$0xff] %vm206, %v323
      %328 = vst.msk [vmem:[%s201 + $0x10] sm:$0xff] %vm206, %v324
      %329 = vst.msk [vmem:[%s201 + $0x18] sm:$0xff] %vm206, %v325
      %p330 = scmp.lt.s32.totalorder %s18, 1
      %s331 = scalar_select %p330, %s18, 1
      %p332 = scmp.lt.s32.totalorder %s19, 0
      %s333 = scalar_select %p332, %s19, 0
      %s334 = smul.addr %s331, 4
      %s335 = sadd.s32 %s333, %s334
      %s336 = smul.addr %s335, 8
      %s337 = scalar_lea.vmem %s3, %s336
      // Predicated region
      $region33: #{tpu_custom_call.1} parent=31 // pred_check
        %p338 = pneg %p116
      $region34: #{tpu_custom_call.1} parent=31 // pred_check_branch
        %340 = sbr.rel (%p338) target = $region36
      $region35: #{tpu_custom_call.1} parent=31 // pred_region
        _
      $region36: #{tpu_custom_call.1} parent=31 // pred_fallthru
        _
    $region32: #{tpu_custom_call.1} parent=5 // pred_fallthru
      _
    %p341 = scmp.le.s32.totalorder 2, %s9
    // Predicated region
    $region37: #{tpu_custom_call.1} parent=5 // pred_check
      %p342 = pneg %p341
    $region38: #{tpu_custom_call.1} parent=5 // pred_check_branch
      %344 = sbr.rel (%p342) target = $region40
    $region39: #{tpu_custom_call.1} parent=5 // pred_region
      %s345 = ssub.s32 %s9, 2
      // Predicated region
      $region41: #{tpu_custom_call.1} parent=39 // pred_check
        %p346 = pneg %p122
      $region42: #{tpu_custom_call.1} parent=39 // pred_check_branch
        %348 = sbr.rel (%p346) target = $region44
      $region43: #{tpu_custom_call.1} parent=39 // pred_region
        %p349 = scmp.lt.s32.totalorder %s20, 1
        %s350 = scalar_select %p349, %s20, 1
        %p351 = scmp.lt.s32.totalorder %s21, 0
        %s352 = scalar_select %p351, %s21, 0
        %s353 = smul.addr %s350, 4
        %s354 = sadd.s32 %s352, %s353
        %s355 = smul.addr %s354, 8
        %s356 = scalar_lea.vmem %s3, %s355
      $region44: #{tpu_custom_call.1} parent=39 // pred_fallthru
        _
    $region40: #{tpu_custom_call.1} parent=5 // pred_fallthru
      _
  $region6: #{tpu_custom_call.1} parent=0 // loop_footer
    %s13 = sadd.s32 1, %s9
  $region7: #{tpu_custom_call.1} parent=0 // loop_footer_branch
    %8 = sbr.rel target = $region3
  $region8: #{tpu_custom_call.1} parent=0 // loop_exit
    _

</llo_original>
